<compile_context>
chip_gen: v7x
topology: tpu7x:2x2x1
jax: 0.10.0
libtpu: 0.0.40
codegen_flags: <defaults>
</compile_context>

<pallas_src>
import functools

import jax
import jax.numpy as jnp
from jax.experimental import pallas as pl
from jax.experimental.pallas import tpu as pltpu


def _round_up(x, m):
    return ((x + m - 1) // m) * m


# ---------- Pass 1: Z0 = relu( (A_hat @ X) @ W1 + b1 ) @ W2  (classes lane-padded) ----------
def _layer1_kernel(a_ref, x_ref, w1_ref, b1_ref, w2_ref, z0_ref, acc_ref):
    k = pl.program_id(1)

    @pl.when(k == 0)
    def _():
        acc_ref[...] = jnp.zeros_like(acc_ref)

    # Accumulate P = A_hat @ X over the tiled source-node contraction axis
    # (cheap order: contracts against F=32 instead of H=128).
    acc_ref[...] += jnp.dot(a_ref[...], x_ref[...],
                            preferred_element_type=jnp.float32)

    @pl.when(k == pl.num_programs(1) - 1)
    def _():
        p = acc_ref[...].astype(jnp.bfloat16)
        h = jnp.dot(p, w1_ref[...], preferred_element_type=jnp.float32)
        h = jnp.maximum(h + b1_ref[...], 0.0)            # bias + ReLU in f32
        # F.dropout(training=False) -> identity.
        # Fold layer-2's dense weight here so only an (N, Cp) slab hits HBM.
        z0 = jnp.dot(h.astype(jnp.bfloat16), w2_ref[...],
                     preferred_element_type=jnp.float32)
        z0_ref[...] = z0.astype(jnp.bfloat16)


# ---------- Pass 2: out = log_softmax( A_hat @ Z0 + b2 ), padded classes masked ----------
def _layer2_kernel(a_ref, z0_ref, b2_ref, out_ref, acc_ref, *, num_classes):
    k = pl.program_id(1)

    @pl.when(k == 0)
    def _():
        acc_ref[...] = jnp.zeros_like(acc_ref)

    acc_ref[...] += jnp.dot(a_ref[...], z0_ref[...],
                            preferred_element_type=jnp.float32)

    @pl.when(k == pl.num_programs(1) - 1)
    def _():
        z = acc_ref[...] + b2_ref[...]
        lane = jax.lax.broadcasted_iota(jnp.int32, z.shape, 1)
        z = jnp.where(lane < num_classes, z, -1e30)      # mask padded classes
        m = jnp.max(z, axis=1, keepdims=True)
        s = z - m
        lse = jnp.log(jnp.sum(jnp.exp(s), axis=1, keepdims=True))
        out_ref[...] = s - lse


def gcn_forward(a_hat, x, w1, b1, w2, b2, *, tm_max=256, tk_max=512):
    N, F = x.shape
    H = w1.shape[1]
    C = w2.shape[1]

    LANE = 128
    f32, bf16 = jnp.float32, jnp.bfloat16

    Np = _round_up(N, LANE)                       # pad nodes to lane multiple
    Cp = _round_up(C, LANE)                       # lane-dense class dimension
    tk = tk_max if Np % tk_max == 0 else (256 if Np % 256 == 0 else LANE)
    tm = tm_max if Np % tm_max == 0 else LANE

    # Pad + cast MXU operands to bf16 (accumulation stays f32 in-kernel).
    a_p = jnp.zeros((Np, Np), bf16).at[:N, :N].set(a_hat.astype(bf16))
    x_p = jnp.zeros((Np, F), bf16).at[:N, :].set(x.astype(bf16))
    w1_b = w1.astype(bf16)
    b1_f = b1.astype(f32).reshape(1, H)
    w2_p = jnp.zeros((H, Cp), bf16).at[:, :C].set(w2.astype(bf16))
    b2_p = jnp.zeros((1, Cp), f32).at[:, :C].set(b2.astype(f32).reshape(1, C))

    grid = (Np // tm, Np // tk)
    cparams = pltpu.CompilerParams(
        dimension_semantics=("parallel", "arbitrary"))

    # ---- pass 1: Z0 = relu((A @ X) @ W1 + b1) @ W2 ----
    z0 = pl.pallas_call(
        _layer1_kernel,
        out_shape=jax.ShapeDtypeStruct((Np, Cp), bf16),
        grid_spec=pltpu.PrefetchScalarGridSpec(
            num_scalar_prefetch=0,
            grid=grid,
            in_specs=[
                pl.BlockSpec((tm, tk), lambda i, k: (i, k)),   # A_hat tile
                pl.BlockSpec((tk, F), lambda i, k: (k, 0)),    # X tile
                pl.BlockSpec((F, H), lambda i, k: (0, 0)),     # W1
                pl.BlockSpec((1, H), lambda i, k: (0, 0)),     # b1
                pl.BlockSpec((H, Cp), lambda i, k: (0, 0)),    # W2 (lane-padded)
            ],
            out_specs=pl.BlockSpec((tm, Cp), lambda i, k: (i, 0)),
            scratch_shapes=[pltpu.VMEM((tm, F), f32)],
        ),
        compiler_params=cparams,
        cost_estimate=pl.CostEstimate(
            flops=2 * Np * Np * F + 2 * Np * F * H + 2 * Np * H * Cp,
            transcendentals=0,
            bytes_accessed=2 * Np * Np + 2 * Np * F + 2 * Np * Cp),
    )(a_p, x_p, w1_b, b1_f, w2_p)

    # ---- pass 2: out = log_softmax(A @ Z0 + b2) ----
    out_p = pl.pallas_call(
        functools.partial(_layer2_kernel, num_classes=C),
        out_shape=jax.ShapeDtypeStruct((Np, Cp), f32),
        grid_spec=pltpu.PrefetchScalarGridSpec(
            num_scalar_prefetch=0,
            grid=grid,
            in_specs=[
                pl.BlockSpec((tm, tk), lambda i, k: (i, k)),   # A_hat tile
                pl.BlockSpec((tk, Cp), lambda i, k: (k, 0)),   # Z0 tile
                pl.BlockSpec((1, Cp), lambda i, k: (0, 0)),    # b2 (lane-padded)
            ],
            out_specs=pl.BlockSpec((tm, Cp), lambda i, k: (i, 0)),
            scratch_shapes=[pltpu.VMEM((tm, Cp), f32)],
        ),
        compiler_params=cparams,
        cost_estimate=pl.CostEstimate(
            flops=2 * Np * Np * Cp,
            transcendentals=Np * Cp,
            bytes_accessed=2 * Np * Np + 2 * Np * Cp + 4 * Np * Cp),
    )(a_p, z0, b2_p)

    return out_p[:N, :C]


def build_normalized_adjacency(edge_index, num_nodes):
    """Dense A_hat = D^{-1/2} (A + I) D^{-1/2}, matching PyG gcn_norm with
    add_self_loops=True and flow='source_to_target' (messages src -> dst)."""
    src, dst = edge_index
    a = jnp.zeros((num_nodes, num_nodes), dtype=jnp.float32)
    a = a.at[dst, src].add(1.0)                      # A[dst, src] = edge weight
    a = a + jnp.eye(num_nodes, dtype=jnp.float32)    # self-loops
    deg = jnp.sum(a, axis=1)
    dinv = jnp.where(deg > 0, 1.0 / jnp.sqrt(deg), 0.0)
    return dinv[:, None] * a * dinv[None, :]


def glorot(key, shape):
    fan_in, fan_out = shape
    limit = jnp.sqrt(6.0 / (fan_in + fan_out))
    return jax.random.uniform(key, shape, jnp.float32, -limit, limit)


if __name__ == "__main__":
    # Small synthetic problem consistent with the module:
    #   N nodes with F-dim taxon-hash features, hidden = 128 (as in Net), C classes.
    N, F_IN, HIDDEN, C = 16, 32, 128, 8

    key = jax.random.PRNGKey(0)
    k_x, k_e, k_w1, k_w2, k_b1, k_b2 = jax.random.split(key, 6)

    # Node features (data.x.float())
    x = jax.random.normal(k_x, (N, F_IN), dtype=jnp.float32)

    # Deterministic random edge_index [2, E]
    E = 40
    src = jax.random.randint(k_e, (E,), 0, N)
    dst = jax.random.randint(jax.random.fold_in(k_e, 1), (E,), 0, N)
    edge_index = jnp.stack([src, dst], axis=0)

    a_hat = build_normalized_adjacency(edge_index, N)

    # GCNConv parameters: weight [in, out] (glorot); small random biases to exercise the path.
    w1 = glorot(k_w1, (F_IN, HIDDEN))
    b1 = 0.1 * jax.random.normal(k_b1, (1, HIDDEN), dtype=jnp.float32)
    w2 = glorot(k_w2, (HIDDEN, C))
    b2 = 0.1 * jax.random.normal(k_b2, (1, C), dtype=jnp.float32)

    out = gcn_forward(a_hat, x, w1, b1, w2, b2)
    out = jax.block_until_ready(out)

    # Pure-JAX f32 reference of the module forward (inference).
    h_ref = jnp.maximum(a_hat @ (x @ w1) + b1, 0.0)
    z_ref = a_hat @ (h_ref @ w2) + b2
    ref = jax.nn.log_softmax(z_ref, axis=1)

    assert out.shape == (N, C)
    assert bool(jnp.all(jnp.isfinite(out)))
    assert jnp.allclose(jnp.sum(jnp.exp(out), axis=1), 1.0, atol=1e-4)
    assert jnp.allclose(out, ref, atol=0.1), float(jnp.max(jnp.abs(out - ref)))

    print("KERNEL_OK")
</pallas_src>

<mosaic_0001>
module attributes {stable_mosaic.version = 11 : i64} {
  func.func @_layer1_kernel(%arg0: i32, %arg1: i32, %arg2: memref<128x128xbf16, #tpu.memory_space<vmem>>, %arg3: memref<128x32xbf16, #tpu.memory_space<vmem>>, %arg4: memref<32x128xbf16, #tpu.memory_space<vmem>>, %arg5: memref<1x128xf32, #tpu.memory_space<vmem>>, %arg6: memref<128x128xbf16, #tpu.memory_space<vmem>>, %arg7: memref<128x128xbf16, #tpu.memory_space<vmem>>, %arg8: memref<128x32xf32, #tpu.memory_space<vmem>>) attributes {dimension_semantics = [#tpu.dimension_semantics<parallel>, #tpu.dimension_semantics<arbitrary>], iteration_bounds = array<i64: 1, 1>, scalar_prefetch = 0 : i64, scratch_operands = 1 : i64, tpu.core_type = #tpu.core_type<tc>, window_params = [{transform_indices = @transform_0, window_bounds = array<i64: 128, 128>}, {transform_indices = @transform_1, window_bounds = array<i64: 128, 32>}, {pipeline_mode = #tpu.pipeline_mode<synchronous>, transform_indices = @transform_2, window_bounds = array<i64: 32, 128>}, {pipeline_mode = #tpu.pipeline_mode<synchronous>, transform_indices = @transform_3, window_bounds = array<i64: 1, 128>}, {pipeline_mode = #tpu.pipeline_mode<synchronous>, transform_indices = @transform_4, window_bounds = array<i64: 128, 128>}, {transform_indices = @transform_5, window_bounds = array<i64: 128, 128>}]} {
    %c0_i32 = arith.constant 0 : i32
    %0 = arith.cmpi eq, %arg1, %c0_i32 : i32
    %1 = arith.extui %0 : i1 to i32
    %c0_i32_0 = arith.constant 0 : i32
    %2 = arith.cmpi ne, %1, %c0_i32_0 : i32
    scf.if %2 {
      %cst_10 = arith.constant 0.000000e+00 : f32
      %12 = vector.broadcast %cst_10 : f32 to vector<128x32xf32>
      %c0_11 = arith.constant 0 : index
      %c0_12 = arith.constant 0 : index
      %13 = vector.load %arg8[%c0_11, %c0_12] : memref<128x32xf32, #tpu.memory_space<vmem>>, vector<128x32xf32>
      tpu.vector_store %arg8[%c0_11, %c0_12], %12 {strides = array<i32>} : memref<128x32xf32, #tpu.memory_space<vmem>>, vector<128x32xf32>,
    } else {
    }
    %c0 = arith.constant 0 : index
    %c0_1 = arith.constant 0 : index
    %3 = vector.load %arg8[%c0, %c0_1] : memref<128x32xf32, #tpu.memory_space<vmem>>, vector<128x32xf32>
    %c0_2 = arith.constant 0 : index
    %c0_3 = arith.constant 0 : index
    %4 = vector.load %arg2[%c0_2, %c0_3] : memref<128x128xbf16, #tpu.memory_space<vmem>>, vector<128x128xbf16>
    %c0_4 = arith.constant 0 : index
    %c0_5 = arith.constant 0 : index
    %5 = vector.load %arg3[%c0_4, %c0_5] : memref<128x32xbf16, #tpu.memory_space<vmem>>, vector<128x32xbf16>
    %cst = arith.constant dense<0.000000e+00> : vector<128x32xf32>
    %6 = tpu.matmul %4, %5, %cst {dimension_numbers = #tpu.dot_dimension_numbers<[1], [0], [0], [1], [0, 0, 1, 1], [], []>} : vector<128x128xbf16>, vector<128x32xbf16>, vector<128x32xf32> -> vector<128x32xf32>
    %7 = arith.addf %3, %6 : vector<128x32xf32>
    %c0_6 = arith.constant 0 : index
    %c0_7 = arith.constant 0 : index
    %8 = vector.load %arg8[%c0_6, %c0_7] : memref<128x32xf32, #tpu.memory_space<vmem>>, vector<128x32xf32>
    tpu.vector_store %arg8[%c0_6, %c0_7], %7 {strides = array<i32>} : memref<128x32xf32, #tpu.memory_space<vmem>>, vector<128x32xf32>,
    %c0_i32_8 = arith.constant 0 : i32
    %9 = arith.cmpi eq, %arg1, %c0_i32_8 : i32
    %10 = arith.extui %9 : i1 to i32
    %c0_i32_9 = arith.constant 0 : i32
    %11 = arith.cmpi ne, %10, %c0_i32_9 : i32
    scf.if %11 {
      %c0_10 = arith.constant 0 : index
      %c0_11 = arith.constant 0 : index
      %12 = vector.load %arg8[%c0_10, %c0_11] : memref<128x32xf32, #tpu.memory_space<vmem>>, vector<128x32xf32>
      %13 = arith.truncf %12 : vector<128x32xf32> to vector<128x32xbf16>
      %c0_12 = arith.constant 0 : index
      %c0_13 = arith.constant 0 : index
      %14 = vector.load %arg4[%c0_12, %c0_13] : memref<32x128xbf16, #tpu.memory_space<vmem>>, vector<32x128xbf16>
      %cst_14 = arith.constant dense<0.000000e+00> : vector<128x128xf32>
      %15 = tpu.matmul %13, %14, %cst_14 {dimension_numbers = #tpu.dot_dimension_numbers<[1], [0], [0], [1], [0, 0, 1, 1], [], []>} : vector<128x32xbf16>, vector<32x128xbf16>, vector<128x128xf32> -> vector<128x128xf32>
      %c0_15 = arith.constant 0 : index
      %c0_16 = arith.constant 0 : index
      %16 = vector.load %arg5[%c0_15, %c0_16] : memref<1x128xf32, #tpu.memory_space<vmem>>, vector<1x128xf32>
      %17 = vector.broadcast %16 : vector<1x128xf32> to vector<128x128xf32>
      %18 = arith.addf %15, %17 : vector<128x128xf32>
      %cst_17 = arith.constant 0.000000e+00 : f32
      %19 = vector.broadcast %cst_17 : f32 to vector<128x128xf32>
      %20 = arith.maximumf %18, %19 : vector<128x128xf32>
      %21 = arith.truncf %20 : vector<128x128xf32> to vector<128x128xbf16>
      %c0_18 = arith.constant 0 : index
      %c0_19 = arith.constant 0 : index
      %22 = vector.load %arg6[%c0_18, %c0_19] : memref<128x128xbf16, #tpu.memory_space<vmem>>, vector<128x128xbf16>
      %cst_20 = arith.constant dense<0.000000e+00> : vector<128x128xf32>
      %23 = tpu.matmul %21, %22, %cst_20 {dimension_numbers = #tpu.dot_dimension_numbers<[1], [0], [0], [1], [0, 0, 1, 1], [], []>} : vector<128x128xbf16>, vector<128x128xbf16>, vector<128x128xf32> -> vector<128x128xf32>
      %24 = arith.truncf %23 : vector<128x128xf32> to vector<128x128xbf16>
      %c0_21 = arith.constant 0 : index
      %c0_22 = arith.constant 0 : index
      %25 = vector.load %arg7[%c0_21, %c0_22] : memref<128x128xbf16, #tpu.memory_space<vmem>>, vector<128x128xbf16>
      tpu.vector_store %arg7[%c0_21, %c0_22], %24 {strides = array<i32>} : memref<128x128xbf16, #tpu.memory_space<vmem>>, vector<128x128xbf16>,
    } else {
    }
    return
  }
  func.func @transform_0(%arg0: i32, %arg1: i32) -> (i32, i32) {
    %c0_i32 = arith.constant 0 : i32
    return %arg0, %arg1 : i32, i32
  }
  func.func @transform_1(%arg0: i32, %arg1: i32) -> (i32, i32) {
    %c0_i32 = arith.constant 0 : i32
    %c0_i32_0 = arith.constant 0 : i32
    return %arg1, %c0_i32 : i32, i32
  }
  func.func @transform_2(%arg0: i32, %arg1: i32) -> (i32, i32) {
    %c0_i32 = arith.constant 0 : i32
    %c0_i32_0 = arith.constant 0 : i32
    %c0_i32_1 = arith.constant 0 : i32
    return %c0_i32, %c0_i32_0 : i32, i32
  }
  func.func @transform_3(%arg0: i32, %arg1: i32) -> (i32, i32) {
    %c0_i32 = arith.constant 0 : i32
    %c0_i32_0 = arith.constant 0 : i32
    %c0_i32_1 = arith.constant 0 : i32
    return %c0_i32, %c0_i32_0 : i32, i32
  }
  func.func @transform_4(%arg0: i32, %arg1: i32) -> (i32, i32) {
    %c0_i32 = arith.constant 0 : i32
    %c0_i32_0 = arith.constant 0 : i32
    %c0_i32_1 = arith.constant 0 : i32
    return %c0_i32, %c0_i32_0 : i32, i32
  }
  func.func @transform_5(%arg0: i32, %arg1: i32) -> (i32, i32) {
    %c0_i32 = arith.constant 0 : i32
    %c0_i32_0 = arith.constant 0 : i32
    return %arg0, %c0_i32 : i32, i32
  }
}

</mosaic_0001>

<llo_original>
// kernel: tpu_custom_call.1
$region0: #{tpu_custom_call.1}
  #allocation0 [shape = 'u32[]', space=smem, size = 0x4, offset = 0x4, fixed_abs, tag = 'smem constant byte address 0x4 - core index']
  #allocation1 [shape = 'u32[144,128]{1,0:T(1,128)}', space=vmem, size = 0x12000, scoped, tag = 'internal scratch']
  #allocation2 [shape = 'f32[128,32]{1,0:T(8,128)}', space=vmem, size = 0x10000, scoped, tag = 'scratch operand']
  %s0 = inlined_call_operand.vmem [shape: bf16[128,128], index: 0, kind: input, shape index: {}]
  %s1 = inlined_call_operand.vmem [shape: bf16[128,32], index: 1, kind: input, shape index: {}]
  %s2 = inlined_call_operand.vmem [shape: bf16[32,128], index: 2, kind: input, shape index: {}]
  %s3 = inlined_call_operand.vmem [shape: f32[1,128], index: 3, kind: input, shape index: {}]
  %s4 = inlined_call_operand.hbm [shape: bf16[128,128], index: 4, kind: input, shape index: {}]
  %s5 = inlined_call_operand.hbm [shape: bf16[128,128], index: 5, kind: output, shape index: {}]
  %s6 = sld [smem:[#allocation0]]
  $region42: #{tpu_custom_call.1} parent=0
    _
  %s8 = ssub.s32 1, %s6
  %s9 = scalar_select 0, %s8, %s6
  $region1: #{tpu_custom_call.1} parent=0
    #allocation3 [shape = 'u8[32768]{0}', space=vmem, size = 0x8000, scoped, tag = 'input window, operand 4, single buffered']
    #allocation4 [shape = 's32[1]{0}', space=sflag, size = 0x4, scoped, tag = 'scoped memory for tpu_custom_call.1']
    #allocation5 [shape = 's32[1]{0}', space=sflag, size = 0x4, scoped, tag = 'scoped memory for tpu_custom_call.1']
    #allocation6 [shape = 'u8[32768]{0}', space=vmem, size = 0x8000, scoped, tag = 'output window, operand 0, single buffered']
    %10 = vsyncpa [#allocation4], 0
    %11 = vsyncpa [#allocation5], 0
    // Predicated region
    $region2: #{tpu_custom_call.1} parent=1 // pred_check
      _
    $region3: #{tpu_custom_call.1} parent=1 // pred_check_branch
      %13 = sbr.rel (0) target = $region5
    $region4: #{tpu_custom_call.1} parent=1 // pred_region
      _
    $region5: #{tpu_custom_call.1} parent=1 // pred_fallthru
      _
    // Predicated region
    $region6: #{tpu_custom_call.1} parent=1 // pred_check
      _
    $region7: #{tpu_custom_call.1} parent=1 // pred_check_branch
      %15 = sbr.rel (0) target = $region9
    $region8: #{tpu_custom_call.1} parent=1 // pred_region
      _
    $region9: #{tpu_custom_call.1} parent=1 // pred_fallthru
      _
    // Predicated region
    $region10: #{tpu_custom_call.1} parent=1 // pred_check
      _
    $region11: #{tpu_custom_call.1} parent=1 // pred_check_branch
      %17 = sbr.rel (0) target = $region13
    $region12: #{tpu_custom_call.1} parent=1 // pred_region
      _
    $region13: #{tpu_custom_call.1} parent=1 // pred_fallthru
      _
    // Predicated region
    $region14: #{tpu_custom_call.1} parent=1 // pred_check
      _
    $region15: #{tpu_custom_call.1} parent=1 // pred_check_branch
      %19 = sbr.rel (0) target = $region17
    $region16: #{tpu_custom_call.1} parent=1 // pred_region
      _
    $region17: #{tpu_custom_call.1} parent=1 // pred_fallthru
      _
    // Predicated region
    $region18: #{tpu_custom_call.1} parent=1 // pred_check
      _
    $region19: #{tpu_custom_call.1} parent=1 // pred_check_branch
      %21 = sbr.rel (0) target = $region21
    $region20: #{tpu_custom_call.1} parent=1 // pred_region
      %s23 = ssub.s32 1024, 1024
      %24 = vsyncadd [#allocation4], %s23
      %s25 = sshll.u32 [#allocation3], 4
      %s26 = int_to_ptr.vmem [resolvable:$true] %s25
      %31 = dma.hbm_to_vmem [thread:$0]  %s4, 1024, %s26, [#allocation4], 64, 64, 4
    $region21: #{tpu_custom_call.1} parent=1 // pred_fallthru
      _
    // Predicated region
    $region22: #{tpu_custom_call.1} parent=1 // pred_check
      _
    $region23: #{tpu_custom_call.1} parent=1 // pred_check_branch
      %33 = sbr.rel (0) target = $region25
    $region24: #{tpu_custom_call.1} parent=1 // pred_region
      %34 = dma.done [#allocation4], 1024
    $region25: #{tpu_custom_call.1} parent=1 // pred_fallthru
      _
    %p36 = scmp.eq.s32.totalorder 0, 0
    // Predicated region
    $region26: #{tpu_custom_call.1} parent=1 // pred_check
      %p37 = pneg %p36
    $region27: #{tpu_custom_call.1} parent=1 // pred_check_branch
      %39 = sbr.rel (%p37) target = $region29
    $region28: #{tpu_custom_call.1} parent=1 // pred_region
      %vm40 = vcmask 261120
      %41 = vst.msk [vmem:[#allocation2] sm:$0xff] %vm40, 0.0
      %42 = vst.msk [vmem:[#allocation2 + $0x8] sm:$0xff] %vm40, 0.0
      %43 = vst.msk [vmem:[#allocation2 + $0x10] sm:$0xff] %vm40, 0.0
      %44 = vst.msk [vmem:[#allocation2 + $0x18] sm:$0xff] %vm40, 0.0
      %45 = vst.msk [vmem:[#allocation2 + $0x20] sm:$0xff] %vm40, 0.0
      %46 = vst.msk [vmem:[#allocation2 + $0x28] sm:$0xff] %vm40, 0.0
      %47 = vst.msk [vmem:[#allocation2 + $0x30] sm:$0xff] %vm40, 0.0
      %48 = vst.msk [vmem:[#allocation2 + $0x38] sm:$0xff] %vm40, 0.0
      %49 = vst.msk [vmem:[#allocation2 + $0x40] sm:$0xff] %vm40, 0.0
      %50 = vst.msk [vmem:[#allocation2 + $0x48] sm:$0xff] %vm40, 0.0
      %51 = vst.msk [vmem:[#allocation2 + $0x50] sm:$0xff] %vm40, 0.0
      %52 = vst.msk [vmem:[#allocation2 + $0x58] sm:$0xff] %vm40, 0.0
      %53 = vst.msk [vmem:[#allocation2 + $0x60] sm:$0xff] %vm40, 0.0
      %54 = vst.msk [vmem:[#allocation2 + $0x68] sm:$0xff] %vm40, 0.0
      %55 = vst.msk [vmem:[#allocation2 + $0x70] sm:$0xff] %vm40, 0.0
      %56 = vst.msk [vmem:[#allocation2 + $0x78] sm:$0xff] %vm40, 0.0
    $region29: #{tpu_custom_call.1} parent=1 // pred_fallthru
      _
    %v57 = vld [vmem:[#allocation2] sm:$0xff]
    %v58 = vld [vmem:[#allocation2 + $0x8] sm:$0xff]
    %v59 = vld [vmem:[#allocation2 + $0x10] sm:$0xff]
    %v60 = vld [vmem:[#allocation2 + $0x18] sm:$0xff]
    %v61 = vld [vmem:[#allocation2 + $0x20] sm:$0xff]
    %v62 = vld [vmem:[#allocation2 + $0x28] sm:$0xff]
    %v63 = vld [vmem:[#allocation2 + $0x30] sm:$0xff]
    %v64 = vld [vmem:[#allocation2 + $0x38] sm:$0xff]
    %v65 = vld [vmem:[#allocation2 + $0x40] sm:$0xff]
    %v66 = vld [vmem:[#allocation2 + $0x48] sm:$0xff]
    %v67 = vld [vmem:[#allocation2 + $0x50] sm:$0xff]
    %v68 = vld [vmem:[#allocation2 + $0x58] sm:$0xff]
    %v69 = vld [vmem:[#allocation2 + $0x60] sm:$0xff]
    %v70 = vld [vmem:[#allocation2 + $0x68] sm:$0xff]
    %v71 = vld [vmem:[#allocation2 + $0x70] sm:$0xff]
    %v72 = vld [vmem:[#allocation2 + $0x78] sm:$0xff]
    %v73 = vld [vmem:[%s0] sm:$0xf]
    %v74 = vld [vmem:[%s0 + $0x4] sm:$0xf]
    %v75 = vld [vmem:[%s0 + $0x8] sm:$0xf]
    %v76 = vld [vmem:[%s0 + $0xc] sm:$0xf]
    %v77 = vld [vmem:[%s0 + $0x10] sm:$0xf]
    %v78 = vld [vmem:[%s0 + $0x14] sm:$0xf]
    %v79 = vld [vmem:[%s0 + $0x18] sm:$0xf]
    %v80 = vld [vmem:[%s0 + $0x1c] sm:$0xf]
    %v81 = vld [vmem:[%s0 + $0x20] sm:$0xf]
    %v82 = vld [vmem:[%s0 + $0x24] sm:$0xf]
    %v83 = vld [vmem:[%s0 + $0x28] sm:$0xf]
    %v84 = vld [vmem:[%s0 + $0x2c] sm:$0xf]
    %v85 = vld [vmem:[%s0 + $0x30] sm:$0xf]
    %v86 = vld [vmem:[%s0 + $0x34] sm:$0xf]
    %v87 = vld [vmem:[%s0 + $0x38] sm:$0xf]
    %v88 = vld [vmem:[%s0 + $0x3c] sm:$0xf]
    %v89 = vld [vmem:[%s1] sm:$0xf]
    %v90 = vld [vmem:[%s1 + $0x4] sm:$0xf]
    %v91 = vld [vmem:[%s1 + $0x8] sm:$0xf]
    %v92 = vld [vmem:[%s1 + $0xc] sm:$0xf]
    %v93 = vld [vmem:[%s1 + $0x10] sm:$0xf]
    %v94 = vld [vmem:[%s1 + $0x14] sm:$0xf]
    %v95 = vld [vmem:[%s1 + $0x18] sm:$0xf]
    %v96 = vld [vmem:[%s1 + $0x1c] sm:$0xf]
    %v97 = vld [vmem:[%s1 + $0x20] sm:$0xf]
    %v98 = vld [vmem:[%s1 + $0x24] sm:$0xf]
    %v99 = vld [vmem:[%s1 + $0x28] sm:$0xf]
    %v100 = vld [vmem:[%s1 + $0x2c] sm:$0xf]
    %v101 = vld [vmem:[%s1 + $0x30] sm:$0xf]
    %v102 = vld [vmem:[%s1 + $0x34] sm:$0xf]
    %v103 = vld [vmem:[%s1 + $0x38] sm:$0xf]
    %v104 = vld [vmem:[%s1 + $0x3c] sm:$0xf]
    %v121 = vunpack.c.l.b16 %v73
    %v122 = vunpack.c.l.b16 %v74
    %v123 = vunpack.c.l.b16 %v75
    %v124 = vunpack.c.l.b16 %v76
    %v125 = vunpack.c.l.b16 %v77
    %v126 = vunpack.c.l.b16 %v78
    %v127 = vunpack.c.l.b16 %v79
    %v128 = vunpack.c.l.b16 %v80
    %v129 = vunpack.c.l.b16 %v81
    %v130 = vunpack.c.l.b16 %v82
    %v131 = vunpack.c.l.b16 %v83
    %v132 = vunpack.c.l.b16 %v84
    %v133 = vunpack.c.l.b16 %v85
    %v134 = vunpack.c.l.b16 %v86
    %v135 = vunpack.c.l.b16 %v87
    %v136 = vunpack.c.l.b16 %v88
    %v137 = vpack.c.b16 %v122, %v121
    %v138 = vpack.c.b16 %v124, %v123
    %v139 = vpack.c.b16 %v126, %v125
    %v140 = vpack.c.b16 %v128, %v127
    %v141 = vpack.c.b16 %v130, %v129
    %v142 = vpack.c.b16 %v132, %v131
    %v143 = vpack.c.b16 %v134, %v133
    %v144 = vpack.c.b16 %v136, %v135
    %v169 = vunpack.c.l.b16 %v89
    %v170 = vunpack.c.l.b16 %v90
    %v171 = vunpack.c.l.b16 %v91
    %v172 = vunpack.c.l.b16 %v92
    %v173 = vunpack.c.l.b16 %v93
    %v174 = vunpack.c.l.b16 %v94
    %v175 = vunpack.c.l.b16 %v95
    %v176 = vunpack.c.l.b16 %v96
    %v177 = vunpack.c.l.b16 %v97
    %v178 = vunpack.c.l.b16 %v98
    %v179 = vunpack.c.l.b16 %v99
    %v180 = vunpack.c.l.b16 %v100
    %v181 = vunpack.c.l.b16 %v101
    %v182 = vunpack.c.l.b16 %v102
    %v183 = vunpack.c.l.b16 %v103
    %v184 = vunpack.c.l.b16 %v104
    %v185 = vpack.c.b16 %v170, %v169
    %v186 = vpack.c.b16 %v172, %v171
    %v187 = vpack.c.b16 %v174, %v173
    %v188 = vpack.c.b16 %v176, %v175
    %v189 = vpack.c.b16 %v178, %v177
    %v190 = vpack.c.b16 %v180, %v179
    %v191 = vpack.c.b16 %v182, %v181
    %v192 = vpack.c.b16 %v184, %v183
    %201 = vmatprep.subr.bf16.mxu0 0
    %202 = vmatpush1.bf16.msra.mxu0 %v185
    %203 = vmatprep.subr.bf16.mxu0 0
    %204 = vmatpush1.bf16.msra.mxu0 %v186
    %205 = vmatprep.subr.bf16.mxu0 0
    %206 = vmatpush1.bf16.msra.mxu0 %v187
    %207 = vmatprep.subr.bf16.mxu0 0
    %208 = vmatpush1.bf16.msra.mxu0 %v188
    %209 = vmatprep.subr.bf16.mxu0 0
    %210 = vmatpush1.bf16.msra.mxu0 %v189
    %211 = vmatprep.subr.bf16.mxu0 0
    %212 = vmatpush1.bf16.msra.mxu0 %v190
    %213 = vmatprep.subr.bf16.mxu0 0
    %214 = vmatpush1.bf16.msra.mxu0 %v191
    %215 = vmatprep.subr.bf16.mxu0 0
    %216 = vmatpush1.bf16.msra.mxu0 %v192
    %217 = vmatprep.subr.bf16.mxu0 0
    %218 = vmatpush1.bf16.msra.mxu0 0
    %219 = vmatprep.subr.bf16.mxu0 0
    %220 = vmatpush1.bf16.msra.mxu0 0
    %221 = vmatprep.subr.bf16.mxu0 0
    %222 = vmatpush1.bf16.msra.mxu0 0
    %223 = vmatprep.subr.bf16.mxu0 0
    %224 = vmatpush1.bf16.msra.mxu0 0
    %225 = vmatprep.subr.bf16.mxu0 0
    %226 = vmatpush1.bf16.msra.mxu0 0
    %227 = vmatprep.subr.bf16.mxu0 0
    %228 = vmatpush1.bf16.msra.mxu0 0
    %229 = vmatprep.subr.bf16.mxu0 0
    %230 = vmatpush1.bf16.msra.mxu0 0
    %231 = vmatprep.subr.bf16.mxu0 0
    %232 = vmatpush1.bf16.msra.mxu0 0
    %233 = vmatprep.mubr.bf16.mxu0 0
    %234 = vmatmul.mubr.bf16.gmra.mrb[0].mxu0 %v137
    %v235 = vpop.f32.mrb[0].mxu0
    %v236 = vadd.f32 0.0, %v235
    %v237 = vpop.f32.mrb[0].mxu0
    %v238 = vpop.f32.mrb[0].mxu0
    %v239 = vadd.f32 0.0, %v238
    %v240 = vpop.f32.mrb[0].mxu0
    %241 = vmatprep.mubr.bf16.mxu0 0
    %242 = vmatmul.mubr.bf16.gmra.mrb[0].mxu0 %v138
    %v243 = vpop.f32.mrb[0].mxu0
    %v244 = vadd.f32 0.0, %v243
    %v245 = vpop.f32.mrb[0].mxu0
    %v246 = vpop.f32.mrb[0].mxu0
    %v247 = vadd.f32 0.0, %v246
    %v248 = vpop.f32.mrb[0].mxu0
    %249 = vmatprep.mubr.bf16.mxu0 0
    %250 = vmatmul.mubr.bf16.gmra.mrb[0].mxu0 %v139
    %v251 = vpop.f32.mrb[0].mxu0
    %v252 = vadd.f32 0.0, %v251
    %v253 = vpop.f32.mrb[0].mxu0
    %v254 = vpop.f32.mrb[0].mxu0
    %v255 = vadd.f32 0.0, %v254
    %v256 = vpop.f32.mrb[0].mxu0
    %257 = vmatprep.mubr.bf16.mxu0 0
    %258 = vmatmul.mubr.bf16.gmra.mrb[0].mxu0 %v140
    %v259 = vpop.f32.mrb[0].mxu0
    %v260 = vadd.f32 0.0, %v259
    %v261 = vpop.f32.mrb[0].mxu0
    %v262 = vpop.f32.mrb[0].mxu0
    %v263 = vadd.f32 0.0, %v262
    %v264 = vpop.f32.mrb[0].mxu0
    %265 = vmatprep.mubr.bf16.mxu0 0
    %266 = vmatmul.mubr.bf16.gmra.mrb[0].mxu0 %v141
    %v267 = vpop.f32.mrb[0].mxu0
    %v268 = vadd.f32 0.0, %v267
    %v269 = vpop.f32.mrb[0].mxu0
    %v270 = vpop.f32.mrb[0].mxu0
    %v271 = vadd.f32 0.0, %v270
    %v272 = vpop.f32.mrb[0].mxu0
    %273 = vmatprep.mubr.bf16.mxu0 0
    %274 = vmatmul.mubr.bf16.gmra.mrb[0].mxu0 %v142
    %v275 = vpop.f32.mrb[0].mxu0
    %v276 = vadd.f32 0.0, %v275
    %v277 = vpop.f32.mrb[0].mxu0
    %v278 = vpop.f32.mrb[0].mxu0
    %v279 = vadd.f32 0.0, %v278
    %v280 = vpop.f32.mrb[0].mxu0
    %281 = vmatprep.mubr.bf16.mxu0 0
    %282 = vmatmul.mubr.bf16.gmra.mrb[0].mxu0 %v143
    %v283 = vpop.f32.mrb[0].mxu0
    %v284 = vadd.f32 0.0, %v283
    %v285 = vpop.f32.mrb[0].mxu0
    %v286 = vpop.f32.mrb[0].mxu0
    %v287 = vadd.f32 0.0, %v286
    %v288 = vpop.f32.mrb[0].mxu0
    %289 = vmatprep.mubr.bf16.mxu0 0
    %290 = vmatmul.mubr.bf16.gmra.mrb[0].mxu0 %v144
    %v291 = vpop.f32.mrb[0].mxu0
    %v292 = vadd.f32 0.0, %v291
    %v293 = vpop.f32.mrb[0].mxu0
    %v294 = vpop.f32.mrb[0].mxu0
    %v295 = vadd.f32 0.0, %v294
    %v296 = vpop.f32.mrb[0].mxu0
    %297 = vdwg.mxu0
    %v298 = vadd.f32 %v57, %v236
    %v299 = vadd.f32 %v58, %v239
    %v300 = vadd.f32 %v59, %v244
    %v301 = vadd.f32 %v60, %v247
    %v302 = vadd.f32 %v61, %v252
    %v303 = vadd.f32 %v62, %v255
    %v304 = vadd.f32 %v63, %v260
    %v305 = vadd.f32 %v64, %v263
    %v306 = vadd.f32 %v65, %v268
    %v307 = vadd.f32 %v66, %v271
    %v308 = vadd.f32 %v67, %v276
    %v309 = vadd.f32 %v68, %v279
    %v310 = vadd.f32 %v69, %v284
    %v311 = vadd.f32 %v70, %v287
    %v312 = vadd.f32 %v71, %v292
    %v313 = vadd.f32 %v72, %v295
    %vm314 = vcmask 261120
    %315 = vst.msk [vmem:[#allocation2] sm:$0xff] %vm314, %v298
    %316 = vst.msk [vmem:[#allocation2 + $0x8] sm:$0xff] %vm314, %v299
    %317 = vst.msk [vmem:[#allocation2 + $0x10] sm:$0xff] %vm314, %v300
    %318 = vst.msk [vmem:[#allocation2 + $0x18] sm:$0xff] %vm314, %v301
    %319 = vst.msk [vmem:[#allocation2 + $0x20] sm:$0xff] %vm314, %v302
    %320 = vst.msk [vmem:[#allocation2 + $0x28] sm:$0xff] %vm314, %v303
    %321 = vst.msk [vmem:[#allocation2 + $0x30] sm:$0xff] %vm314, %v304
    %322 = vst.msk [vmem:[#allocation2 + $0x38] sm:$0xff] %vm314, %v305
    %323 = vst.msk [vmem:[#allocation2 + $0x40] sm:$0xff] %vm314, %v306
    %324 = vst.msk [vmem:[#allocation2 + $0x48] sm:$0xff] %vm314, %v307
    %325 = vst.msk [vmem:[#allocation2 + $0x50] sm:$0xff] %vm314, %v308
    %326 = vst.msk [vmem:[#allocation2 + $0x58] sm:$0xff] %vm314, %v309
    %327 = vst.msk [vmem:[#allocation2 + $0x60] sm:$0xff] %vm314, %v310
    %328 = vst.msk [vmem:[#allocation2 + $0x68] sm:$0xff] %vm314, %v311
    %329 = vst.msk [vmem:[#allocation2 + $0x70] sm:$0xff] %vm314, %v312
    %330 = vst.msk [vmem:[#allocation2 + $0x78] sm:$0xff] %vm314, %v313
    // Predicated region
    $region30: #{tpu_custom_call.1} parent=1 // pred_check
      %p331 = pneg %p36
    $region31: #{tpu_custom_call.1} parent=1 // pred_check_branch
      %333 = sbr.rel (%p331) target = $region33
    $region32: #{tpu_custom_call.1} parent=1 // pred_region
      %v334 = vld [vmem:[#allocation2] sm:$0xff]
      %v335 = vld [vmem:[#allocation2 + $0x8] sm:$0xff]
      %v336 = vld [vmem:[#allocation2 + $0x10] sm:$0xff]
      %v337 = vld [vmem:[#allocation2 + $0x18] sm:$0xff]
      %v338 = vld [vmem:[#allocation2 + $0x20] sm:$0xff]
      %v339 = vld [vmem:[#allocation2 + $0x28] sm:$0xff]
      %v340 = vld [vmem:[#allocation2 + $0x30] sm:$0xff]
      %v341 = vld [vmem:[#allocation2 + $0x38] sm:$0xff]
      %v342 = vld [vmem:[#allocation2 + $0x40] sm:$0xff]
      %v343 = vld [vmem:[#allocation2 + $0x48] sm:$0xff]
      %v344 = vld [vmem:[#allocation2 + $0x50] sm:$0xff]
      %v345 = vld [vmem:[#allocation2 + $0x58] sm:$0xff]
      %v346 = vld [vmem:[#allocation2 + $0x60] sm:$0xff]
      %v347 = vld [vmem:[#allocation2 + $0x68] sm:$0xff]
      %v348 = vld [vmem:[#allocation2 + $0x70] sm:$0xff]
      %v349 = vld [vmem:[#allocation2 + $0x78] sm:$0xff]
      %v350 = vpack.c.bf16 %v335, %v334
      %v351 = vpack.c.bf16 %v337, %v336
      %v352 = vpack.c.bf16 %v339, %v338
      %v353 = vpack.c.bf16 %v341, %v340
      %v354 = vpack.c.bf16 %v343, %v342
      %v355 = vpack.c.bf16 %v345, %v344
      %v356 = vpack.c.bf16 %v347, %v346
      %v357 = vpack.c.bf16 %v349, %v348
      %v358 = vld [vmem:[%s2] sm:$0xf]
      %v359 = vld [vmem:[%s2 + $0x4] sm:$0xf]
      %v360 = vld [vmem:[%s2 + $0x8] sm:$0xf]
      %v361 = vld [vmem:[%s2 + $0xc] sm:$0xf]
      %v362 = vld [vmem:[%s3] sm:$0x1]
      %v364 = vlaneseq
      %v365 = vshrl.u32 %v364, 7
      %v366 = vsub.s32 0, %v365
      %v367 = vrot.slane %v362, %v366
      %v373 = vunpack.c.l.b16 %v358
      %v374 = vunpack.c.l.b16 %v359
      %v375 = vunpack.c.l.b16 %v360
      %v376 = vunpack.c.l.b16 %v361
      %v377 = vpack.c.b16 %v374, %v373
      %v378 = vpack.c.b16 %v376, %v375
      %v382 = vsel %vm314, %v350, 0
      %v385 = vsel %vm314, %v351, 0
      %v388 = vsel %vm314, %v352, 0
      %v391 = vsel %vm314, %v353, 0
      %v394 = vsel %vm314, %v354, 0
      %v397 = vsel %vm314, %v355, 0
      %v400 = vsel %vm314, %v356, 0
      %v403 = vsel %vm314, %v357, 0
      %405 = vmatprep.subr.bf16.mxu0 0
      %406 = vmatpush1.bf16.msra.mxu0 %v377
      %407 = vmatprep.subr.bf16.mxu0 0
      %408 = vmatpush1.bf16.msra.mxu0 %v378
      %409 = vmatprep.subr.bf16.mxu0 0
      %410 = vmatpush1.bf16.msra.mxu0 0
      %411 = vmatprep.subr.bf16.mxu0 0
      %412 = vmatpush1.bf16.msra.mxu0 0
      %413 = vmatprep.subr.bf16.mxu0 0
      %414 = vmatpush1.bf16.msra.mxu0 0
      %415 = vmatprep.subr.bf16.mxu0 0
      %416 = vmatpush1.bf16.msra.mxu0 0
      %417 = vmatprep.subr.bf16.mxu0 0
      %418 = vmatpush1.bf16.msra.mxu0 0
      %419 = vmatprep.subr.bf16.mxu0 0
      %420 = vmatpush1.bf16.msra.mxu0 0
      %421 = vmatprep.subr.bf16.mxu0 0
      %422 = vmatpush1.bf16.msra.mxu0 0
      %423 = vmatprep.subr.bf16.mxu0 0
      %424 = vmatpush1.bf16.msra.mxu0 0
      %425 = vmatprep.subr.bf16.mxu0 0
      %426 = vmatpush1.bf16.msra.mxu0 0
      %427 = vmatprep.subr.bf16.mxu0 0
      %428 = vmatpush1.bf16.msra.mxu0 0
      %429 = vmatprep.subr.bf16.mxu0 0
      %430 = vmatpush1.bf16.msra.mxu0 0
      %431 = vmatprep.subr.bf16.mxu0 0
      %432 = vmatpush1.bf16.msra.mxu0 0
      %433 = vmatprep.subr.bf16.mxu0 0
      %434 = vmatpush1.bf16.msra.mxu0 0
      %435 = vmatprep.subr.bf16.mxu0 0
      %436 = vmatpush1.bf16.msra.mxu0 0
      %437 = vmatprep.mubr.bf16.mxu0 0
      %438 = vmatmul.mubr.bf16.gmra.mrb[0].mxu0 %v382
      %v439 = vpop.f32.mrb[0].mxu0
      %v440 = vadd.f32 %v367, %v439
      %v441 = vpop.f32.mrb[0].mxu0
      %v442 = vpop.f32.mrb[0].mxu0
      %v443 = vadd.f32 %v367, %v442
      %v444 = vpop.f32.mrb[0].mxu0
      %445 = vmatprep.mubr.bf16.mxu0 0
      %446 = vmatmul.mubr.bf16.gmra.mrb[0].mxu0 %v385
      %v447 = vpop.f32.mrb[0].mxu0
      %v448 = vadd.f32 %v367, %v447
      %v449 = vpop.f32.mrb[0].mxu0
      %v450 = vpop.f32.mrb[0].mxu0
      %v451 = vadd.f32 %v367, %v450
      %v452 = vpop.f32.mrb[0].mxu0
      %453 = vmatprep.mubr.bf16.mxu0 0
      %454 = vmatmul.mubr.bf16.gmra.mrb[0].mxu0 %v388
      %v455 = vpop.f32.mrb[0].mxu0
      %v456 = vadd.f32 %v367, %v455
      %v457 = vpop.f32.mrb[0].mxu0
      %v458 = vpop.f32.mrb[0].mxu0
      %v459 = vadd.f32 %v367, %v458
      %v460 = vpop.f32.mrb[0].mxu0
      %461 = vmatprep.mubr.bf16.mxu0 0
      %462 = vmatmul.mubr.bf16.gmra.mrb[0].mxu0 %v391
      %v463 = vpop.f32.mrb[0].mxu0
      %v464 = vadd.f32 %v367, %v463
      %v465 = vpop.f32.mrb[0].mxu0
      %v466 = vpop.f32.mrb[0].mxu0
      %v467 = vadd.f32 %v367, %v466
      %v468 = vpop.f32.mrb[0].mxu0
      %469 = vmatprep.mubr.bf16.mxu0 0
      %470 = vmatmul.mubr.bf16.gmra.mrb[0].mxu0 %v394
      %v471 = vpop.f32.mrb[0].mxu0
      %v472 = vadd.f32 %v367, %v471
      %v473 = vpop.f32.mrb[0].mxu0
      %v474 = vpop.f32.mrb[0].mxu0
      %v475 = vadd.f32 %v367, %v474
      %v476 = vpop.f32.mrb[0].mxu0
      %477 = vmatprep.mubr.bf16.mxu0 0
      %478 = vmatmul.mubr.bf16.gmra.mrb[0].mxu0 %v397
      %v479 = vpop.f32.mrb[0].mxu0
      %v480 = vadd.f32 %v367, %v479
      %v481 = vpop.f32.mrb[0].mxu0
      %v482 = vpop.f32.mrb[0].mxu0
      %v483 = vadd.f32 %v367, %v482
      %v484 = vpop.f32.mrb[0].mxu0
      %485 = vmatprep.mubr.bf16.mxu0 0
      %486 = vmatmul.mubr.bf16.gmra.mrb[0].mxu0 %v400
      %v487 = vpop.f32.mrb[0].mxu0
      %v488 = vadd.f32 %v367, %v487
      %v489 = vpop.f32.mrb[0].mxu0
      %v490 = vpop.f32.mrb[0].mxu0
      %v491 = vadd.f32 %v367, %v490
      %v492 = vpop.f32.mrb[0].mxu0
      %493 = vmatprep.mubr.bf16.mxu0 0
      %494 = vmatmul.mubr.bf16.gmra.mrb[0].mxu0 %v403
      %v495 = vpop.f32.mrb[0].mxu0
      %v496 = vadd.f32 %v367, %v495
      %v497 = vpop.f32.mrb[0].mxu0
      %v498 = vpop.f32.mrb[0].mxu0
      %v499 = vadd.f32 %v367, %v498
      %v500 = vpop.f32.mrb[0].mxu0
      %501 = vdwg.mxu0
      %v502 = vmax.f32 %v440, 0.0
      %v503 = vmax.f32 %v443, 0.0
      %v504 = vmax.f32 %v448, 0.0
      %v505 = vmax.f32 %v451, 0.0
      %v506 = vmax.f32 %v456, 0.0
      %v507 = vmax.f32 %v459, 0.0
      %v508 = vmax.f32 %v464, 0.0
      %v509 = vmax.f32 %v467, 0.0
      %v510 = vmax.f32 %v472, 0.0
      %v511 = vmax.f32 %v475, 0.0
      %v512 = vmax.f32 %v480, 0.0
      %v513 = vmax.f32 %v483, 0.0
      %v514 = vmax.f32 %v488, 0.0
      %v515 = vmax.f32 %v491, 0.0
      %v516 = vmax.f32 %v496, 0.0
      %v517 = vmax.f32 %v499, 0.0
      %v518 = vpack.c.bf16 %v503, %v502
      %v519 = vpack.c.bf16 %v505, %v504
      %v520 = vpack.c.bf16 %v507, %v506
      %v521 = vpack.c.bf16 %v509, %v508
      %v522 = vpack.c.bf16 %v511, %v510
      %v523 = vpack.c.bf16 %v513, %v512
      %v524 = vpack.c.bf16 %v515, %v514
      %v525 = vpack.c.bf16 %v517, %v516
      %v526 = vld [vmem:[#allocation3] sm:$0xf]
      %v527 = vld [vmem:[#allocation3 + $0x4] sm:$0xf]
      %v528 = vld [vmem:[#allocation3 + $0x8] sm:$0xf]
      %v529 = vld [vmem:[#allocation3 + $0xc] sm:$0xf]
      %v530 = vld [vmem:[#allocation3 + $0x10] sm:$0xf]
      %v531 = vld [vmem:[#allocation3 + $0x14] sm:$0xf]
      %v532 = vld [vmem:[#allocation3 + $0x18] sm:$0xf]
      %v533 = vld [vmem:[#allocation3 + $0x1c] sm:$0xf]
      %v534 = vld [vmem:[#allocation3 + $0x20] sm:$0xf]
      %v535 = vld [vmem:[#allocation3 + $0x24] sm:$0xf]
      %v536 = vld [vmem:[#allocation3 + $0x28] sm:$0xf]
      %v537 = vld [vmem:[#allocation3 + $0x2c] sm:$0xf]
      %v538 = vld [vmem:[#allocation3 + $0x30] sm:$0xf]
      %v539 = vld [vmem:[#allocation3 + $0x34] sm:$0xf]
      %v540 = vld [vmem:[#allocation3 + $0x38] sm:$0xf]
      %v541 = vld [vmem:[#allocation3 + $0x3c] sm:$0xf]
      %v558 = vunpack.c.l.b16 %v526
      %v559 = vunpack.c.l.b16 %v527
      %v560 = vunpack.c.l.b16 %v528
      %v561 = vunpack.c.l.b16 %v529
      %v562 = vunpack.c.l.b16 %v530
      %v563 = vunpack.c.l.b16 %v531
      %v564 = vunpack.c.l.b16 %v532
      %v565 = vunpack.c.l.b16 %v533
      %v566 = vunpack.c.l.b16 %v534
      %v567 = vunpack.c.l.b16 %v535
      %v568 = vunpack.c.l.b16 %v536
      %v569 = vunpack.c.l.b16 %v537
      %v570 = vunpack.c.l.b16 %v538
      %v571 = vunpack.c.l.b16 %v539
      %v572 = vunpack.c.l.b16 %v540
      %v573 = vunpack.c.l.b16 %v541
      %v574 = vpack.c.b16 %v559, %v558
      %v575 = vpack.c.b16 %v561, %v560
      %v576 = vpack.c.b16 %v563, %v562
      %v577 = vpack.c.b16 %v565, %v564
      %v578 = vpack.c.b16 %v567, %v566
      %v579 = vpack.c.b16 %v569, %v568
      %v580 = vpack.c.b16 %v571, %v570
      %v581 = vpack.c.b16 %v573, %v572
      %590 = vmatprep.subr.bf16.mxu0 0
      %591 = vmatpush1.bf16.msra.mxu0 %v574
      %592 = vmatprep.subr.bf16.mxu0 0
      %593 = vmatpush1.bf16.msra.mxu0 %v575
      %594 = vmatprep.subr.bf16.mxu0 0
      %595 = vmatpush1.bf16.msra.mxu0 %v576
      %596 = vmatprep.subr.bf16.mxu0 0
      %597 = vmatpush1.bf16.msra.mxu0 %v577
      %598 = vmatprep.subr.bf16.mxu0 0
      %599 = vmatpush1.bf16.msra.mxu0 %v578
      %600 = vmatprep.subr.bf16.mxu0 0
      %601 = vmatpush1.bf16.msra.mxu0 %v579
      %602 = vmatprep.subr.bf16.mxu0 0
      %603 = vmatpush1.bf16.msra.mxu0 %v580
      %604 = vmatprep.subr.bf16.mxu0 0
      %605 = vmatpush1.bf16.msra.mxu0 %v581
      %606 = vmatprep.subr.bf16.mxu0 0
      %607 = vmatpush1.bf16.msra.mxu0 0
      %608 = vmatprep.subr.bf16.mxu0 0
      %609 = vmatpush1.bf16.msra.mxu0 0
      %610 = vmatprep.subr.bf16.mxu0 0
      %611 = vmatpush1.bf16.msra.mxu0 0
      %612 = vmatprep.subr.bf16.mxu0 0
      %613 = vmatpush1.bf16.msra.mxu0 0
      %614 = vmatprep.subr.bf16.mxu0 0
      %615 = vmatpush1.bf16.msra.mxu0 0
      %616 = vmatprep.subr.bf16.mxu0 0
      %617 = vmatpush1.bf16.msra.mxu0 0
      %618 = vmatprep.subr.bf16.mxu0 0
      %619 = vmatpush1.bf16.msra.mxu0 0
      %620 = vmatprep.subr.bf16.mxu0 0
      %621 = vmatpush1.bf16.msra.mxu0 0
      %622 = vmatprep.mubr.bf16.mxu0 0
      %623 = vmatmul.mubr.bf16.gmra.mrb[0].mxu0 %v518
      %v624 = vpop.f32.mrb[0].mxu0
      %v625 = vadd.f32 0.0, %v624
      %v626 = vpop.f32.mrb[0].mxu0
      %v627 = vpop.f32.mrb[0].mxu0
      %v628 = vadd.f32 0.0, %v627
      %v629 = vpop.f32.mrb[0].mxu0
      %630 = vmatprep.mubr.bf16.mxu0 0
      %631 = vmatmul.mubr.bf16.gmra.mrb[0].mxu0 %v519
      %v632 = vpop.f32.mrb[0].mxu0
      %v633 = vadd.f32 0.0, %v632
      %v634 = vpop.f32.mrb[0].mxu0
      %v635 = vpop.f32.mrb[0].mxu0
      %v636 = vadd.f32 0.0, %v635
      %v637 = vpop.f32.mrb[0].mxu0
      %638 = vmatprep.mubr.bf16.mxu0 0
      %639 = vmatmul.mubr.bf16.gmra.mrb[0].mxu0 %v520
      %v640 = vpop.f32.mrb[0].mxu0
      %v641 = vadd.f32 0.0, %v640
      %v642 = vpop.f32.mrb[0].mxu0
      %v643 = vpop.f32.mrb[0].mxu0
      %v644 = vadd.f32 0.0, %v643
      %v645 = vpop.f32.mrb[0].mxu0
      %646 = vmatprep.mubr.bf16.mxu0 0
      %647 = vmatmul.mubr.bf16.gmra.mrb[0].mxu0 %v521
      %v648 = vpop.f32.mrb[0].mxu0
      %v649 = vadd.f32 0.0, %v648
      %v650 = vpop.f32.mrb[0].mxu0
      %v651 = vpop.f32.mrb[0].mxu0
      %v652 = vadd.f32 0.0, %v651
      %v653 = vpop.f32.mrb[0].mxu0
      %654 = vmatprep.mubr.bf16.mxu0 0
      %655 = vmatmul.mubr.bf16.gmra.mrb[0].mxu0 %v522
      %v656 = vpop.f32.mrb[0].mxu0
      %v657 = vadd.f32 0.0, %v656
      %v658 = vpop.f32.mrb[0].mxu0
      %v659 = vpop.f32.mrb[0].mxu0
      %v660 = vadd.f32 0.0, %v659
      %v661 = vpop.f32.mrb[0].mxu0
      %662 = vmatprep.mubr.bf16.mxu0 0
      %663 = vmatmul.mubr.bf16.gmra.mrb[0].mxu0 %v523
      %v664 = vpop.f32.mrb[0].mxu0
      %v665 = vadd.f32 0.0, %v664
      %v666 = vpop.f32.mrb[0].mxu0
      %v667 = vpop.f32.mrb[0].mxu0
      %v668 = vadd.f32 0.0, %v667
      %v669 = vpop.f32.mrb[0].mxu0
      %670 = vmatprep.mubr.bf16.mxu0 0
      %671 = vmatmul.mubr.bf16.gmra.mrb[0].mxu0 %v524
      %v672 = vpop.f32.mrb[0].mxu0
      %v673 = vadd.f32 0.0, %v672
      %v674 = vpop.f32.mrb[0].mxu0
      %v675 = vpop.f32.mrb[0].mxu0
      %v676 = vadd.f32 0.0, %v675
      %v677 = vpop.f32.mrb[0].mxu0
      %678 = vmatprep.mubr.bf16.mxu0 0
      %679 = vmatmul.mubr.bf16.gmra.mrb[0].mxu0 %v525
      %v680 = vpop.f32.mrb[0].mxu0
      %v681 = vadd.f32 0.0, %v680
      %v682 = vpop.f32.mrb[0].mxu0
      %v683 = vpop.f32.mrb[0].mxu0
      %v684 = vadd.f32 0.0, %v683
      %v685 = vpop.f32.mrb[0].mxu0
      %686 = vdwg.mxu0
      %v687 = vpack.c.bf16 %v628, %v625
      %v688 = vpack.c.bf16 %v636, %v633
      %v689 = vpack.c.bf16 %v644, %v641
      %v690 = vpack.c.bf16 %v652, %v649
      %v691 = vpack.c.bf16 %v660, %v657
      %v692 = vpack.c.bf16 %v668, %v665
      %v693 = vpack.c.bf16 %v676, %v673
      %v694 = vpack.c.bf16 %v684, %v681
      %v703 = vunpack.c.l.b16 %v687
      %v704 = vunpack.c.h.b16 %v687
      %v705 = vunpack.c.l.b16 %v688
      %v706 = vunpack.c.h.b16 %v688
      %v707 = vunpack.c.l.b16 %v689
      %v708 = vunpack.c.h.b16 %v689
      %v709 = vunpack.c.l.b16 %v690
      %v710 = vunpack.c.h.b16 %v690
      %v711 = vunpack.c.l.b16 %v691
      %v712 = vunpack.c.h.b16 %v691
      %v713 = vunpack.c.l.b16 %v692
      %v714 = vunpack.c.h.b16 %v692
      %v715 = vunpack.c.l.b16 %v693
      %v716 = vunpack.c.h.b16 %v693
      %v717 = vunpack.c.l.b16 %v694
      %v718 = vunpack.c.h.b16 %v694
      %v719 = vpack.c.b16 %v703, %v703
      %v720 = vpack.c.b16 %v704, %v704
      %v721 = vpack.c.b16 %v705, %v705
      %v722 = vpack.c.b16 %v706, %v706
      %v723 = vpack.c.b16 %v707, %v707
      %v724 = vpack.c.b16 %v708, %v708
      %v725 = vpack.c.b16 %v709, %v709
      %v726 = vpack.c.b16 %v710, %v710
      %v727 = vpack.c.b16 %v711, %v711
      %v728 = vpack.c.b16 %v712, %v712
      %v729 = vpack.c.b16 %v713, %v713
      %v730 = vpack.c.b16 %v714, %v714
      %v731 = vpack.c.b16 %v715, %v715
      %v732 = vpack.c.b16 %v716, %v716
      %v733 = vpack.c.b16 %v717, %v717
      %v734 = vpack.c.b16 %v718, %v718
      %751 = vst [vmem:[#allocation6] sm:$0xf] %v719
      %752 = vst [vmem:[#allocation6 + $0x4] sm:$0xf] %v720
      %753 = vst [vmem:[#allocation6 + $0x8] sm:$0xf] %v721
      %754 = vst [vmem:[#allocation6 + $0xc] sm:$0xf] %v722
      %755 = vst [vmem:[#allocation6 + $0x10] sm:$0xf] %v723
      %756 = vst [vmem:[#allocation6 + $0x14] sm:$0xf] %v724
      %757 = vst [vmem:[#allocation6 + $0x18] sm:$0xf] %v725
      %758 = vst [vmem:[#allocation6 + $0x1c] sm:$0xf] %v726
      %759 = vst [vmem:[#allocation6 + $0x20] sm:$0xf] %v727
      %760 = vst [vmem:[#allocation6 + $0x24] sm:$0xf] %v728
      %761 = vst [vmem:[#allocation6 + $0x28] sm:$0xf] %v729
      %762 = vst [vmem:[#allocation6 + $0x2c] sm:$0xf] %v730
      %763 = vst [vmem:[#allocation6 + $0x30] sm:$0xf] %v731
      %764 = vst [vmem:[#allocation6 + $0x34] sm:$0xf] %v732
      %765 = vst [vmem:[#allocation6 + $0x38] sm:$0xf] %v733
      %766 = vst [vmem:[#allocation6 + $0x3c] sm:$0xf] %v734
    $region33: #{tpu_custom_call.1} parent=1 // pred_fallthru
      _
    // Predicated region
    $region34: #{tpu_custom_call.1} parent=1 // pred_check
      _
    $region35: #{tpu_custom_call.1} parent=1 // pred_check_branch
      %768 = sbr.rel (0) target = $region37
    $region36: #{tpu_custom_call.1} parent=1 // pred_region
      %s770 = ssub.s32 1024, 1024
      %771 = vsyncadd [#allocation5], %s770
      %s772 = sshll.u32 [#allocation6], 4
      %s773 = int_to_ptr.vmem [resolvable:$true] %s772
      %778 = dma.vmem_to_hbm [thread:$0]  %s773, 1024, %s5, [#allocation5], 64, 64, 4
    $region37: #{tpu_custom_call.1} parent=1 // pred_fallthru
      _
    // Predicated region
    $region38: #{tpu_custom_call.1} parent=1 // pred_check
      _
    $region39: #{tpu_custom_call.1} parent=1 // pred_check_branch
      %780 = sbr.rel (0) target = $region41
    $region40: #{tpu_custom_call.1} parent=1 // pred_region
      %781 = dma.done [#allocation5], 1024
    $region41: #{tpu_custom_call.1} parent=1 // pred_fallthru
      _
    %782 = vsyncpa [#allocation4], 1
    %783 = vsyncpa [#allocation5], 1

</llo_original>
